<compile_context>
chip_gen: v7x
topology: tpu7x:2x2x1
jax: 0.10.0
libtpu: 0.0.40
codegen_flags: <defaults>
</compile_context>

<pallas_src>
import functools

import jax
import jax.numpy as jnp
from jax.experimental import pallas as pl
from jax.experimental.pallas import tpu as pltpu


def _round_up(x, m):
    return ((x + m - 1) // m) * m


def _pick_block_b(B):
    """Batch tile: multiple of 8, big enough to amortize ~0.35us/grid-step overhead,
    small enough for scoped VMEM, and (when B allows) giving >=2 grid steps so both
    v7x TensorCores get work."""
    if B <= 8:
        return _round_up(max(B, 1), 8)
    cap = 512                           # ~1.6-3.2 MiB double-buffered x; near HBM roofline
    half = _round_up(-(-B // 2), 8)     # ceil(B/2) rounded up to the sublane multiple
    return max(8, min(cap, half, _round_up(B, 8)))


def _net_kernel(x_ref, w1_ref, b1_ref, w2_ref, b2_ref, out_ref):
    # x_ref : (TB, D_in)   w1_ref: (D_in, Hp)   b1_ref: (1, Hp)   [biases f32]
    # w2_ref: (Hp, Op)     b2_ref: (1, Op)      out_ref: (TB, Op)
    x = x_ref[...]

    # fc1 + sigmoid: MXU matmul with f32 accumulation; logistic runs on the EUP.
    z1 = jnp.dot(x, w1_ref[...], preferred_element_type=jnp.float32) + b1_ref[...]
    a1 = jax.nn.sigmoid(z1)

    # fc2: cast activations back to the streaming dtype for the MXU, accumulate f32.
    z2 = jnp.dot(a1.astype(w2_ref.dtype), w2_ref[...],
                 preferred_element_type=jnp.float32) + b2_ref[...]

    # Softmax over the lane-dense padded feature axis.  Padded logits carry bias
    # -1e9, so exp underflows to exactly 0 and never touches the denominator.
    z2_max = jnp.max(z2, axis=-1, keepdims=True)
    e = jnp.exp(z2 - z2_max)
    denom = jnp.sum(e, axis=-1, keepdims=True)
    # approx=False keeps full f32 accuracy (approx=True would only be ~1e-3 rel.).
    out_ref[...] = (e * pl.reciprocal(denom, approx=False)).astype(out_ref.dtype)


@functools.partial(jax.jit, static_argnames=("block_b", "compute_dtype"))
def net_forward(x_nchw, w1, b1, w2, b2, *, block_b=None, compute_dtype=jnp.float32):
    """x_nchw: [B, C, H, W].  w1: [in, hidden], w2: [hidden, out] (transposed vs.
    torch Linear.weight).  Returns softmax probabilities [B, out]."""
    B = x_nchw.shape[0]
    d_in, h = w1.shape
    h2, o = w2.shape
    assert h2 == h

    if block_b is None:
        block_b = _pick_block_b(B)
    assert block_b % 8 == 0, "block_b must be a multiple of 8 (f32 sublane tiling)"

    h_pad = max(128, _round_up(h, 128))   # 200 -> 256: lane-dense hidden layer
    o_pad = max(128, _round_up(o, 128))   # 10  -> 128: unmasked output stores

    # Flatten (torch nn.Flatten keeps the batch dim) — contiguous reshape, stays in JAX.
    x = x_nchw.reshape(B, -1).astype(compute_dtype)
    assert x.shape[1] == d_in

    # Exact zero-padding.  Padded hidden units get z1 = 0 -> sigmoid = 0.5 but
    # multiply zero W2 rows, contributing nothing.  Padded output logits get
    # bias -1e9 so softmax assigns them exactly 0 probability.
    w1p = jnp.zeros((d_in, h_pad), compute_dtype).at[:, :h].set(w1.astype(compute_dtype))
    b1p = jnp.zeros((1, h_pad), jnp.float32).at[:, :h].set(
        b1.reshape(1, h).astype(jnp.float32))
    w2p = jnp.zeros((h_pad, o_pad), compute_dtype).at[:h, :o].set(w2.astype(compute_dtype))
    b2p = jnp.full((1, o_pad), -1e9, jnp.float32).at[:, :o].set(
        b2.reshape(1, o).astype(jnp.float32))

    itemsize = jnp.dtype(compute_dtype).itemsize
    cost = pl.CostEstimate(
        flops=2 * B * (d_in * h_pad + h_pad * o_pad),
        transcendentals=B * (h_pad + o_pad),
        bytes_accessed=(B * d_in * itemsize            # x streamed once
                        + d_in * h_pad * itemsize      # W1 (resident, fetched once)
                        + h_pad * o_pad * itemsize     # W2 (resident, fetched once)
                        + (h_pad + o_pad) * 4          # biases
                        + B * o_pad * 4),              # output
    )

    grid = (pl.cdiv(B, block_b),)
    out_padded = pl.pallas_call(
        _net_kernel,
        out_shape=jax.ShapeDtypeStruct((B, o_pad), jnp.float32),
        grid_spec=pl.GridSpec(
            grid=grid,
            in_specs=[
                pl.BlockSpec((block_b, d_in), lambda i: (i, 0)),  # x tile per batch block
                pl.BlockSpec((d_in, h_pad), lambda i: (0, 0)),    # W1 (VMEM-resident)
                pl.BlockSpec((1, h_pad), lambda i: (0, 0)),       # b1
                pl.BlockSpec((h_pad, o_pad), lambda i: (0, 0)),   # W2 (VMEM-resident)
                pl.BlockSpec((1, o_pad), lambda i: (0, 0)),       # b2
            ],
            out_specs=pl.BlockSpec((block_b, o_pad), lambda i: (i, 0)),
        ),
        compiler_params=pltpu.CompilerParams(
            dimension_semantics=("parallel",),
        ),
        cost_estimate=cost,
    )(x, w1p, b1p, w2p, b2p)

    # Drop padded output columns (padding glue, stays in JAX).
    return out_padded[:, :o]


if __name__ == "__main__":
    # Sizes implied by the module: Net(784, 200, 10), MNIST-like input [B, 1, 28, 28].
    input_size, hidden_size, output_size = 784, 200, 10
    batch = 16  # small; multiple of 8; block picker gives 2 grid steps of 8 rows

    key = jax.random.PRNGKey(0)
    kx, kw1, kb1, kw2, kb2 = jax.random.split(key, 5)

    x = jax.random.normal(kx, (batch, 1, 28, 28), dtype=jnp.float32)

    # Deterministic synthetic parameters (not a checkpoint load).
    # Stored as [in_features, out_features] (transpose of torch Linear.weight).
    w1 = jax.random.normal(kw1, (input_size, hidden_size), dtype=jnp.float32) * 0.05
    b1 = jax.random.normal(kb1, (hidden_size,), dtype=jnp.float32) * 0.05
    w2 = jax.random.normal(kw2, (hidden_size, output_size), dtype=jnp.float32) * 0.05
    b2 = jax.random.normal(kb2, (output_size,), dtype=jnp.float32) * 0.05

    # Pure-JAX reference of the same forward pass.
    xf = x.reshape(batch, -1)
    ref = jax.nn.softmax(jax.nn.sigmoid(xf @ w1 + b1) @ w2 + b2, axis=1)

    # f32 path: strict tolerance.
    out = jax.block_until_ready(net_forward(x, w1, b1, w2, b2))
    assert out.shape == (batch, output_size)
    assert jnp.allclose(out, ref, atol=1e-4, rtol=1e-4)
    assert jnp.allclose(jnp.sum(out, axis=1), 1.0, atol=1e-5)

    # bf16 streaming path (halves HBM traffic on x/W): relaxed tolerance.
    out_bf16 = jax.block_until_ready(
        net_forward(x, w1, b1, w2, b2, compute_dtype=jnp.bfloat16))
    assert out_bf16.shape == (batch, output_size)
    assert jnp.allclose(out_bf16, ref, atol=2.5e-2, rtol=2.5e-2)
    assert jnp.allclose(jnp.sum(out_bf16, axis=1), 1.0, atol=1e-3)

    print("KERNEL_OK")
</pallas_src>

<mosaic_0001>
module attributes {stable_mosaic.version = 11 : i64} {
  func.func @_net_kernel(%arg0: i32, %arg1: memref<8x784xf32, #tpu.memory_space<vmem>>, %arg2: memref<784x256xf32, #tpu.memory_space<vmem>>, %arg3: memref<1x256xf32, #tpu.memory_space<vmem>>, %arg4: memref<256x128xf32, #tpu.memory_space<vmem>>, %arg5: memref<1x128xf32, #tpu.memory_space<vmem>>, %arg6: memref<8x128xf32, #tpu.memory_space<vmem>>) attributes {dimension_semantics = [#tpu.dimension_semantics<parallel>], iteration_bounds = array<i64: 2>, scalar_prefetch = 0 : i64, scratch_operands = 0 : i64, tpu.core_type = #tpu.core_type<tc>, window_params = [{transform_indices = @transform_0, window_bounds = array<i64: 8, 784>}, {pipeline_mode = #tpu.pipeline_mode<synchronous>, transform_indices = @transform_1, window_bounds = array<i64: 784, 256>}, {pipeline_mode = #tpu.pipeline_mode<synchronous>, transform_indices = @transform_2, window_bounds = array<i64: 1, 256>}, {pipeline_mode = #tpu.pipeline_mode<synchronous>, transform_indices = @transform_3, window_bounds = array<i64: 256, 128>}, {pipeline_mode = #tpu.pipeline_mode<synchronous>, transform_indices = @transform_4, window_bounds = array<i64: 1, 128>}, {transform_indices = @transform_5, window_bounds = array<i64: 8, 128>}]} {
    %c0 = arith.constant 0 : index
    %c0_0 = arith.constant 0 : index
    %0 = vector.load %arg1[%c0, %c0_0] : memref<8x784xf32, #tpu.memory_space<vmem>>, vector<8x784xf32>
    %c0_1 = arith.constant 0 : index
    %c0_2 = arith.constant 0 : index
    %1 = vector.load %arg2[%c0_1, %c0_2] : memref<784x256xf32, #tpu.memory_space<vmem>>, vector<784x256xf32>
    %cst = arith.constant dense<0.000000e+00> : vector<8x256xf32>
    %2 = tpu.matmul %0, %1, %cst {dimension_numbers = #tpu.dot_dimension_numbers<[1], [0], [0], [1], [0, 0, 1, 1], [], []>} : vector<8x784xf32>, vector<784x256xf32>, vector<8x256xf32> -> vector<8x256xf32>
    %c0_3 = arith.constant 0 : index
    %c0_4 = arith.constant 0 : index
    %3 = vector.load %arg3[%c0_3, %c0_4] : memref<1x256xf32, #tpu.memory_space<vmem>>, vector<1x256xf32>
    %4 = vector.broadcast %3 : vector<1x256xf32> to vector<8x256xf32>
    %5 = arith.addf %2, %4 : vector<8x256xf32>
    %6 = arith.negf %5 : vector<8x256xf32>
    %7 = math.exp %6 : vector<8x256xf32>
    %cst_5 = arith.constant 1.000000e+00 : f32
    %8 = vector.broadcast %cst_5 : f32 to vector<8x256xf32>
    %9 = arith.addf %8, %7 : vector<8x256xf32>
    %10 = arith.divf %8, %9 : vector<8x256xf32>
    %c0_6 = arith.constant 0 : index
    %c0_7 = arith.constant 0 : index
    %11 = vector.load %arg4[%c0_6, %c0_7] : memref<256x128xf32, #tpu.memory_space<vmem>>, vector<256x128xf32>
    %cst_8 = arith.constant dense<0.000000e+00> : vector<8x128xf32>
    %12 = tpu.matmul %10, %11, %cst_8 {dimension_numbers = #tpu.dot_dimension_numbers<[1], [0], [0], [1], [0, 0, 1, 1], [], []>} : vector<8x256xf32>, vector<256x128xf32>, vector<8x128xf32> -> vector<8x128xf32>
    %c0_9 = arith.constant 0 : index
    %c0_10 = arith.constant 0 : index
    %13 = vector.load %arg5[%c0_9, %c0_10] : memref<1x128xf32, #tpu.memory_space<vmem>>, vector<1x128xf32>
    %14 = vector.broadcast %13 : vector<1x128xf32> to vector<8x128xf32>
    %15 = arith.addf %12, %14 : vector<8x128xf32>
    %cst_11 = arith.constant dense<0xFF800000> : vector<8xf32>
    %16 = vector.multi_reduction <maximumf>, %15, %cst_11 [1] : vector<8x128xf32> to vector<8xf32>
    %17 = vector.shape_cast %16 : vector<8xf32> to vector<8x1xf32>
    %18 = vector.broadcast %17 : vector<8x1xf32> to vector<8x128xf32>
    %19 = arith.subf %15, %18 : vector<8x128xf32>
    %20 = math.exp %19 : vector<8x128xf32>
    %cst_12 = arith.constant dense<0.000000e+00> : vector<8xf32>
    %21 = vector.multi_reduction <add>, %20, %cst_12 [1] : vector<8x128xf32> to vector<8xf32>
    %22 = vector.shape_cast %21 : vector<8xf32> to vector<8x1xf32>
    %23 = tpu.reciprocal %22 : vector<8x1xf32> -> vector<8x1xf32>
    %24 = vector.broadcast %23 : vector<8x1xf32> to vector<8x128xf32>
    %25 = arith.mulf %20, %24 : vector<8x128xf32>
    %c0_13 = arith.constant 0 : index
    %c0_14 = arith.constant 0 : index
    %26 = vector.load %arg6[%c0_13, %c0_14] : memref<8x128xf32, #tpu.memory_space<vmem>>, vector<8x128xf32>
    tpu.vector_store %arg6[%c0_13, %c0_14], %25 {strides = array<i32>} : memref<8x128xf32, #tpu.memory_space<vmem>>, vector<8x128xf32>,
    return
  }
  func.func @transform_0(%arg0: i32) -> (i32, i32) {
    %c0_i32 = arith.constant 0 : i32
    %c0_i32_0 = arith.constant 0 : i32
    return %arg0, %c0_i32 : i32, i32
  }
  func.func @transform_1(%arg0: i32) -> (i32, i32) {
    %c0_i32 = arith.constant 0 : i32
    %c0_i32_0 = arith.constant 0 : i32
    %c0_i32_1 = arith.constant 0 : i32
    return %c0_i32, %c0_i32_0 : i32, i32
  }
  func.func @transform_2(%arg0: i32) -> (i32, i32) {
    %c0_i32 = arith.constant 0 : i32
    %c0_i32_0 = arith.constant 0 : i32
    %c0_i32_1 = arith.constant 0 : i32
    return %c0_i32, %c0_i32_0 : i32, i32
  }
  func.func @transform_3(%arg0: i32) -> (i32, i32) {
    %c0_i32 = arith.constant 0 : i32
    %c0_i32_0 = arith.constant 0 : i32
    %c0_i32_1 = arith.constant 0 : i32
    return %c0_i32, %c0_i32_0 : i32, i32
  }
  func.func @transform_4(%arg0: i32) -> (i32, i32) {
    %c0_i32 = arith.constant 0 : i32
    %c0_i32_0 = arith.constant 0 : i32
    %c0_i32_1 = arith.constant 0 : i32
    return %c0_i32, %c0_i32_0 : i32, i32
  }
  func.func @transform_5(%arg0: i32) -> (i32, i32) {
    %c0_i32 = arith.constant 0 : i32
    %c0_i32_0 = arith.constant 0 : i32
    return %arg0, %c0_i32 : i32, i32
  }
}

</mosaic_0001>

<llo_original>
// kernel: net_forward.1
$region0: #{net_forward.1}
  #allocation0 [shape = 'u32[]', space=smem, size = 0x4, offset = 0x4, fixed_abs, tag = 'smem constant byte address 0x4 - core index']
  #allocation1 [shape = 'u32[144,128]{1,0:T(1,128)}', space=vmem, size = 0x12000, scoped, tag = 'internal scratch']
  %s0 = inlined_call_operand.vmem [shape: f32[16,784], index: 0, kind: input, shape index: {}]
  %s1 = inlined_call_operand.vmem [shape: f32[784,256], index: 1, kind: input, shape index: {}]
  %s2 = inlined_call_operand.vmem [shape: f32[1,256], index: 2, kind: input, shape index: {}]
  %s3 = inlined_call_operand.vmem [shape: f32[256,128], index: 3, kind: input, shape index: {}]
  %s4 = inlined_call_operand.vmem [shape: f32[1,128], index: 4, kind: input, shape index: {}]
  %s5 = inlined_call_operand.hbm [shape: f32[16,128], index: 5, kind: output, shape index: {}]
  %s6 = sld [smem:[#allocation0]]
  $region53: #{net_forward.1} parent=0
    _
  %s8 = ssub.s32 1, %s6
  %s9 = scalar_select 0, %s8, %s6
  $region1: #{net_forward.1} parent=0
    #allocation2 [shape = 'u8[8192]{0}', space=vmem, size = 0x2000, scoped, tag = 'output window, operand 0']
    #allocation3 [shape = 's32[2]{0}', space=sflag, size = 0x8, scoped, tag = 'scoped memory for net_forward.1']
    %10 = vsyncpa [#allocation3], 0
    %s11 = scalar_lea.sflag [#allocation3], 1
    %12 = vsyncpa %s11, 0
    loop: start=0, step=1, limit=4
    $region2: #{net_forward.1} parent=1 // loop_pre_header
      _
    $region3: #{net_forward.1} parent=1 // loop_header
      %s14 = sphi 0, %s18
      %p15 = scmp.ge.s32.totalorder %s14, 4
      %s24 = sphi 0, %s26
      %s27 = sphi 0, %s24
      %s28 = sphi 0, %s27
      %s44 = sphi 0, %s28
      %s48 = sphi 0, %s48
      %s50 = sphi 0, %s48
      %s51 = sphi 0, %s50
      %s65 = sphi 0, %s51
      %s69 = sphi 0, %s69
      %s71 = sphi 0, %s69
      %s72 = sphi 0, %s71
      %s86 = sphi 0, %s72
      %s90 = sphi 0, %s90
      %s92 = sphi 0, %s90
      %s93 = sphi 0, %s92
      %s107 = sphi 0, %s93
      %s111 = sphi 0, %s111
      %s113 = sphi 0, %s111
      %s114 = sphi 0, %s113
      %s128 = sphi 0, %s114
      %s134 = sphi 0, %s136
      %s137 = sphi 0, %s134
      %s138 = sphi 0, %s137
      %s154 = sphi 0, %s138
    $region4: #{net_forward.1} parent=1 // loop_header_branch
      %17 = sbr.rel (%p15) target = $region8
    $region5: #{net_forward.1} parent=1 // loop_body
      %s19 = ssub.s32 %s14, 1
      %s20 = ssub.s32 %s14, 2
      %s21 = sadd.s32 %s14, 1
      %s22 = ssub.s32 %s14, %s21
      %p23 = scmp.eq.s32.totalorder %s22, 0
      %s25 = sadd.s32 %s24, 1
      %s26 = scalar_select %p23, %s24, %s25
      %p29 = pneg %p23
      %p30 = scmp.eq.s32.totalorder %s14, 1
      %p31 = por %p29, %p30
      %p32 = scmp.ne.s32.totalorder %s24, %s27
      %p33 = scmp.eq.s32.totalorder %s14, 0
      %p34 = por %p32, %p33
      %p35 = scmp.ne.s32.totalorder %s24, %s27
      %p36 = scmp.eq.s32.totalorder %s19, 1
      %p37 = por %p35, %p36
      %p38 = scmp.ne.s32.totalorder %s27, %s28
      %p39 = scmp.eq.s32.totalorder %s19, 0
      %p40 = por %p38, %p39
      %p41 = scmp.ne.s32.totalorder %s27, %s28
      %p42 = scmp.eq.s32.totalorder %s20, 1
      %p43 = por %p41, %p42
      %p45 = scmp.ne.s32.totalorder %s28, %s44
      %p46 = scmp.eq.s32.totalorder %s20, 0
      %p47 = por %p45, %p46
      %s49 = sadd.s32 %s48, 1
      %p52 = scmp.eq.s32.totalorder %s14, 1
      %p53 = scmp.ne.s32.totalorder %s48, %s50
      %p54 = scmp.eq.s32.totalorder %s14, 0
      %p55 = por %p53, %p54
      %p56 = scmp.ne.s32.totalorder %s48, %s50
      %p57 = scmp.eq.s32.totalorder %s19, 1
      %p58 = por %p56, %p57
      %p59 = scmp.ne.s32.totalorder %s50, %s51
      %p60 = scmp.eq.s32.totalorder %s19, 0
      %p61 = por %p59, %p60
      %p62 = scmp.ne.s32.totalorder %s50, %s51
      %p63 = scmp.eq.s32.totalorder %s20, 1
      %p64 = por %p62, %p63
      %p66 = scmp.ne.s32.totalorder %s51, %s65
      %p67 = scmp.eq.s32.totalorder %s20, 0
      %p68 = por %p66, %p67
      %s70 = sadd.s32 %s69, 1
      %p73 = scmp.eq.s32.totalorder %s14, 1
      %p74 = scmp.ne.s32.totalorder %s69, %s71
      %p75 = scmp.eq.s32.totalorder %s14, 0
      %p76 = por %p74, %p75
      %p77 = scmp.ne.s32.totalorder %s69, %s71
      %p78 = scmp.eq.s32.totalorder %s19, 1
      %p79 = por %p77, %p78
      %p80 = scmp.ne.s32.totalorder %s71, %s72
      %p81 = scmp.eq.s32.totalorder %s19, 0
      %p82 = por %p80, %p81
      %p83 = scmp.ne.s32.totalorder %s71, %s72
      %p84 = scmp.eq.s32.totalorder %s20, 1
      %p85 = por %p83, %p84
      %p87 = scmp.ne.s32.totalorder %s72, %s86
      %p88 = scmp.eq.s32.totalorder %s20, 0
      %p89 = por %p87, %p88
      %s91 = sadd.s32 %s90, 1
      %p94 = scmp.eq.s32.totalorder %s14, 1
      %p95 = scmp.ne.s32.totalorder %s90, %s92
      %p96 = scmp.eq.s32.totalorder %s14, 0
      %p97 = por %p95, %p96
      %p98 = scmp.ne.s32.totalorder %s90, %s92
      %p99 = scmp.eq.s32.totalorder %s19, 1
      %p100 = por %p98, %p99
      %p101 = scmp.ne.s32.totalorder %s92, %s93
      %p102 = scmp.eq.s32.totalorder %s19, 0
      %p103 = por %p101, %p102
      %p104 = scmp.ne.s32.totalorder %s92, %s93
      %p105 = scmp.eq.s32.totalorder %s20, 1
      %p106 = por %p104, %p105
      %p108 = scmp.ne.s32.totalorder %s93, %s107
      %p109 = scmp.eq.s32.totalorder %s20, 0
      %p110 = por %p108, %p109
      %s112 = sadd.s32 %s111, 1
      %p115 = scmp.eq.s32.totalorder %s14, 1
      %p116 = scmp.ne.s32.totalorder %s111, %s113
      %p117 = scmp.eq.s32.totalorder %s14, 0
      %p118 = por %p116, %p117
      %p119 = scmp.ne.s32.totalorder %s111, %s113
      %p120 = scmp.eq.s32.totalorder %s19, 1
      %p121 = por %p119, %p120
      %p122 = scmp.ne.s32.totalorder %s113, %s114
      %p123 = scmp.eq.s32.totalorder %s19, 0
      %p124 = por %p122, %p123
      %p125 = scmp.ne.s32.totalorder %s113, %s114
      %p126 = scmp.eq.s32.totalorder %s20, 1
      %p127 = por %p125, %p126
      %p129 = scmp.ne.s32.totalorder %s114, %s128
      %p130 = scmp.eq.s32.totalorder %s20, 0
      %p131 = por %p129, %p130
      %s132 = ssub.s32 %s14, %s21
      %p133 = scmp.eq.s32.totalorder %s132, 0
      %s135 = sadd.s32 %s134, 1
      %s136 = scalar_select %p133, %s134, %s135
      %p139 = pneg %p133
      %p140 = scmp.eq.s32.totalorder %s14, 1
      %p141 = por %p139, %p140
      %p142 = scmp.ne.s32.totalorder %s134, %s137
      %p143 = scmp.eq.s32.totalorder %s14, 0
      %p144 = por %p142, %p143
      %p145 = scmp.ne.s32.totalorder %s134, %s137
      %p146 = scmp.eq.s32.totalorder %s19, 1
      %p147 = por %p145, %p146
      %p148 = scmp.ne.s32.totalorder %s137, %s138
      %p149 = scmp.eq.s32.totalorder %s19, 0
      %p150 = por %p148, %p149
      %p151 = scmp.ne.s32.totalorder %s137, %s138
      %p152 = scmp.eq.s32.totalorder %s20, 1
      %p153 = por %p151, %p152
      %p155 = scmp.ne.s32.totalorder %s138, %s154
      %p156 = scmp.eq.s32.totalorder %s20, 0
      %p157 = por %p155, %p156
      %p158 = scmp.le.s32.totalorder 1, %s14
      %p159 = scmp.lt.s32.totalorder %s14, 3
      %p160 = pnand %p158, %p159
      %p161 = pneg %p160
      // Predicated region
      $region9: #{net_forward.1} parent=5 // pred_check
        _
      $region10: #{net_forward.1} parent=5 // pred_check_branch
        %163 = sbr.rel (%p160) target = $region12
      $region11: #{net_forward.1} parent=5 // pred_region
        %s164 = ssub.s32 %s14, 1
        // Predicated region
        $region13: #{net_forward.1} parent=11 // pred_check
          %p165 = pneg %p61
        $region14: #{net_forward.1} parent=11 // pred_check_branch
          %167 = sbr.rel (%p165) target = $region16
        $region15: #{net_forward.1} parent=11 // pred_region
          _
        $region16: #{net_forward.1} parent=11 // pred_fallthru
          _
        // Predicated region
        $region17: #{net_forward.1} parent=11 // pred_check
          %p168 = pneg %p82
        $region18: #{net_forward.1} parent=11 // pred_check_branch
          %170 = sbr.rel (%p168) target = $region20
        $region19: #{net_forward.1} parent=11 // pred_region
          _
        $region20: #{net_forward.1} parent=11 // pred_fallthru
          _
        // Predicated region
        $region21: #{net_forward.1} parent=11 // pred_check
          %p171 = pneg %p103
        $region22: #{net_forward.1} parent=11 // pred_check_branch
          %173 = sbr.rel (%p171) target = $region24
        $region23: #{net_forward.1} parent=11 // pred_region
          _
        $region24: #{net_forward.1} parent=11 // pred_fallthru
          _
        // Predicated region
        $region25: #{net_forward.1} parent=11 // pred_check
          %p174 = pneg %p124
        $region26: #{net_forward.1} parent=11 // pred_check_branch
          %176 = sbr.rel (%p174) target = $region28
        $region27: #{net_forward.1} parent=11 // pred_region
          _
        $region28: #{net_forward.1} parent=11 // pred_fallthru
          _
      $region12: #{net_forward.1} parent=5 // pred_fallthru
        _
      %p177 = scmp.lt.s32.totalorder %s14, 2
      // Predicated region
      $region29: #{net_forward.1} parent=5 // pred_check
        %p178 = pneg %p177
      $region30: #{net_forward.1} parent=5 // pred_check_branch
        %180 = sbr.rel (%p178) target = $region32
      $region31: #{net_forward.1} parent=5 // pred_region
        // Predicated region
        $region33: #{net_forward.1} parent=31 // pred_check
          %p181 = pneg %p34
        $region34: #{net_forward.1} parent=31 // pred_check_branch
          %183 = sbr.rel (%p181) target = $region36
        $region35: #{net_forward.1} parent=31 // pred_region
          %p184 = scmp.lt.s32.totalorder %s14, 1
          %s185 = scalar_select %p184, %s14, 1
          %s186 = smul.addr %s185, 7
          %s187 = smul.addr %s186, 8
          %s188 = scalar_lea.vmem %s0, %s187
        $region36: #{net_forward.1} parent=31 // pred_fallthru
          _
      $region32: #{net_forward.1} parent=5 // pred_fallthru
        _
      %p189 = scmp.le.s32.totalorder 1, %s14
      %p190 = scmp.lt.s32.totalorder %s14, 3
      %p191 = pnand %p189, %p190
      %p192 = pneg %p191
      // Predicated region
      $region37: #{net_forward.1} parent=5 // pred_check
        _
      $region38: #{net_forward.1} parent=5 // pred_check_branch
        %194 = sbr.rel (%p191) target = $region40
      $region39: #{net_forward.1} parent=5 // pred_region
        %s195 = ssub.s32 %s14, 1
        %p196 = scmp.lt.s32.totalorder %s19, 1
        %s197 = scalar_select %p196, %s19, 1
        %s198 = smul.addr %s197, 7
        %s199 = smul.addr %s198, 8
        %s200 = scalar_lea.vmem %s0, %s199
        %p201 = pneg %p40
        %p202 = pneg %p37
        %p203 = pneg %p61
        %p204 = pneg %p58
        %p205 = pneg %p82
        %p206 = pneg %p79
        %p207 = pneg %p103
        %p208 = pneg %p100
        %p209 = pneg %p124
        %p210 = pneg %p121
        %p211 = pneg %p150
        %p212 = pneg %p147
        %s213 = sand.u32 %s137, 1
        %s214 = scalar_lea.sflag [#allocation3], %s213
        %s215 = sand.u32 %s137, 1
        %s216 = smul.addr %s215, 8
        %s217 = scalar_lea.vmem [#allocation2], %s216
        %p218 = scmp.lt.s32.totalorder %s19, 1
        %s219 = scalar_select %p218, %s19, 1
        %s220 = smul.addr %s219, 7
        %s221 = smul.addr %s220, 8
        %s222 = scalar_lea.vmem %s0, %s221
        %v223 = vld [vmem:[%s222] sm:$0xff]
        %v224 = vld [vmem:[%s222 + $0x8] sm:$0xff]
        %v225 = vld [vmem:[%s222 + $0x10] sm:$0xff]
        %v226 = vld [vmem:[%s222 + $0x18] sm:$0xff]
        %v227 = vld [vmem:[%s222 + $0x20] sm:$0xff]
        %v228 = vld [vmem:[%s222 + $0x28] sm:$0xff]
        %v229 = vld [vmem:[%s222 + $0x30] sm:$0xff]
        %v230 = vld [vmem:[%s1] sm:$0xff]
        %v231 = vld [vmem:[%s1 + $0x8] sm:$0xff]
        %v232 = vld [vmem:[%s1 + $0x10] sm:$0xff]
        %v233 = vld [vmem:[%s1 + $0x18] sm:$0xff]
        %v234 = vld [vmem:[%s1 + $0x20] sm:$0xff]
        %v235 = vld [vmem:[%s1 + $0x28] sm:$0xff]
        %v236 = vld [vmem:[%s1 + $0x30] sm:$0xff]
        %v237 = vld [vmem:[%s1 + $0x38] sm:$0xff]
        %v238 = vld [vmem:[%s1 + $0x40] sm:$0xff]
        %v239 = vld [vmem:[%s1 + $0x48] sm:$0xff]
        %v240 = vld [vmem:[%s1 + $0x50] sm:$0xff]
        %v241 = vld [vmem:[%s1 + $0x58] sm:$0xff]
        %v242 = vld [vmem:[%s1 + $0x60] sm:$0xff]
        %v243 = vld [vmem:[%s1 + $0x68] sm:$0xff]
        %v244 = vld [vmem:[%s1 + $0x70] sm:$0xff]
        %v245 = vld [vmem:[%s1 + $0x78] sm:$0xff]
        %v246 = vld [vmem:[%s1 + $0x80] sm:$0xff]
        %v247 = vld [vmem:[%s1 + $0x88] sm:$0xff]
        %v248 = vld [vmem:[%s1 + $0x90] sm:$0xff]
        %v249 = vld [vmem:[%s1 + $0x98] sm:$0xff]
        %v250 = vld [vmem:[%s1 + $0xa0] sm:$0xff]
        %v251 = vld [vmem:[%s1 + $0xa8] sm:$0xff]
        %v252 = vld [vmem:[%s1 + $0xb0] sm:$0xff]
        %v253 = vld [vmem:[%s1 + $0xb8] sm:$0xff]
        %v254 = vld [vmem:[%s1 + $0xc0] sm:$0xff]
        %v255 = vld [vmem:[%s1 + $0xc8] sm:$0xff]
        %v256 = vld [vmem:[%s1 + $0xd0] sm:$0xff]
        %v257 = vld [vmem:[%s1 + $0xd8] sm:$0xff]
        %v258 = vld [vmem:[%s1 + $0xe0] sm:$0xff]
        %v259 = vld [vmem:[%s1 + $0xe8] sm:$0xff]
        %v260 = vld [vmem:[%s1 + $0xf0] sm:$0xff]
        %v261 = vld [vmem:[%s1 + $0xf8] sm:$0xff]
        %v262 = vld [vmem:[%s1 + $0x100] sm:$0xff]
        %v263 = vld [vmem:[%s1 + $0x108] sm:$0xff]
        %v264 = vld [vmem:[%s1 + $0x110] sm:$0xff]
        %v265 = vld [vmem:[%s1 + $0x118] sm:$0xff]
        %v266 = vld [vmem:[%s1 + $0x120] sm:$0xff]
        %v267 = vld [vmem:[%s1 + $0x128] sm:$0xff]
        %v268 = vld [vmem:[%s1 + $0x130] sm:$0xff]
        %v269 = vld [vmem:[%s1 + $0x138] sm:$0xff]
        %v270 = vld [vmem:[%s1 + $0x140] sm:$0xff]
        %v271 = vld [vmem:[%s1 + $0x148] sm:$0xff]
        %v272 = vld [vmem:[%s1 + $0x150] sm:$0xff]
        %v273 = vld [vmem:[%s1 + $0x158] sm:$0xff]
        %v274 = vld [vmem:[%s1 + $0x160] sm:$0xff]
        %v275 = vld [vmem:[%s1 + $0x168] sm:$0xff]
        %v276 = vld [vmem:[%s1 + $0x170] sm:$0xff]
        %v277 = vld [vmem:[%s1 + $0x178] sm:$0xff]
        %v278 = vld [vmem:[%s1 + $0x180] sm:$0xff]
        %v279 = vld [vmem:[%s1 + $0x188] sm:$0xff]
        %v280 = vld [vmem:[%s1 + $0x190] sm:$0xff]
        %v281 = vld [vmem:[%s1 + $0x198] sm:$0xff]
        %v282 = vld [vmem:[%s1 + $0x1a0] sm:$0xff]
        %v283 = vld [vmem:[%s1 + $0x1a8] sm:$0xff]
        %v284 = vld [vmem:[%s1 + $0x1b0] sm:$0xff]
        %v285 = vld [vmem:[%s1 + $0x1b8] sm:$0xff]
        %v286 = vld [vmem:[%s1 + $0x1c0] sm:$0xff]
        %v287 = vld [vmem:[%s1 + $0x1c8] sm:$0xff]
        %v288 = vld [vmem:[%s1 + $0x1d0] sm:$0xff]
        %v289 = vld [vmem:[%s1 + $0x1d8] sm:$0xff]
        %v290 = vld [vmem:[%s1 + $0x1e0] sm:$0xff]
        %v291 = vld [vmem:[%s1 + $0x1e8] sm:$0xff]
        %v292 = vld [vmem:[%s1 + $0x1f0] sm:$0xff]
        %v293 = vld [vmem:[%s1 + $0x1f8] sm:$0xff]
        %v294 = vld [vmem:[%s1 + $0x200] sm:$0xff]
        %v295 = vld [vmem:[%s1 + $0x208] sm:$0xff]
        %v296 = vld [vmem:[%s1 + $0x210] sm:$0xff]
        %v297 = vld [vmem:[%s1 + $0x218] sm:$0xff]
        %v298 = vld [vmem:[%s1 + $0x220] sm:$0xff]
        %v299 = vld [vmem:[%s1 + $0x228] sm:$0xff]
        %v300 = vld [vmem:[%s1 + $0x230] sm:$0xff]
        %v301 = vld [vmem:[%s1 + $0x238] sm:$0xff]
        %v302 = vld [vmem:[%s1 + $0x240] sm:$0xff]
        %v303 = vld [vmem:[%s1 + $0x248] sm:$0xff]
        %v304 = vld [vmem:[%s1 + $0x250] sm:$0xff]
        %v305 = vld [vmem:[%s1 + $0x258] sm:$0xff]
        %v306 = vld [vmem:[%s1 + $0x260] sm:$0xff]
        %v307 = vld [vmem:[%s1 + $0x268] sm:$0xff]
        %v308 = vld [vmem:[%s1 + $0x270] sm:$0xff]
        %v309 = vld [vmem:[%s1 + $0x278] sm:$0xff]
        %v310 = vld [vmem:[%s1 + $0x280] sm:$0xff]
        %v311 = vld [vmem:[%s1 + $0x288] sm:$0xff]
        %v312 = vld [vmem:[%s1 + $0x290] sm:$0xff]
        %v313 = vld [vmem:[%s1 + $0x298] sm:$0xff]
        %v314 = vld [vmem:[%s1 + $0x2a0] sm:$0xff]
        %v315 = vld [vmem:[%s1 + $0x2a8] sm:$0xff]
        %v316 = vld [vmem:[%s1 + $0x2b0] sm:$0xff]
        %v317 = vld [vmem:[%s1 + $0x2b8] sm:$0xff]
        %v318 = vld [vmem:[%s1 + $0x2c0] sm:$0xff]
        %v319 = vld [vmem:[%s1 + $0x2c8] sm:$0xff]
        %v320 = vld [vmem:[%s1 + $0x2d0] sm:$0xff]
        %v321 = vld [vmem:[%s1 + $0x2d8] sm:$0xff]
        %v322 = vld [vmem:[%s1 + $0x2e0] sm:$0xff]
        %v323 = vld [vmem:[%s1 + $0x2e8] sm:$0xff]
        %v324 = vld [vmem:[%s1 + $0x2f0] sm:$0xff]
        %v325 = vld [vmem:[%s1 + $0x2f8] sm:$0xff]
        %v326 = vld [vmem:[%s1 + $0x300] sm:$0xff]
        %v327 = vld [vmem:[%s1 + $0x308] sm:$0xff]
        %v328 = vld [vmem:[%s1 + $0x310] sm:$0xff]
        %v329 = vld [vmem:[%s1 + $0x318] sm:$0xff]
        %v330 = vld [vmem:[%s1 + $0x320] sm:$0xff]
        %v331 = vld [vmem:[%s1 + $0x328] sm:$0xff]
        %v332 = vld [vmem:[%s1 + $0x330] sm:$0xff]
        %v333 = vld [vmem:[%s1 + $0x338] sm:$0xff]
        %v334 = vld [vmem:[%s1 + $0x340] sm:$0xff]
        %v335 = vld [vmem:[%s1 + $0x348] sm:$0xff]
        %v336 = vld [vmem:[%s1 + $0x350] sm:$0xff]
        %v337 = vld [vmem:[%s1 + $0x358] sm:$0xff]
        %v338 = vld [vmem:[%s1 + $0x360] sm:$0xff]
        %v339 = vld [vmem:[%s1 + $0x368] sm:$0xff]
        %v340 = vld [vmem:[%s1 + $0x370] sm:$0xff]
        %v341 = vld [vmem:[%s1 + $0x378] sm:$0xff]
        %v342 = vld [vmem:[%s1 + $0x380] sm:$0xff]
        %v343 = vld [vmem:[%s1 + $0x388] sm:$0xff]
        %v344 = vld [vmem:[%s1 + $0x390] sm:$0xff]
        %v345 = vld [vmem:[%s1 + $0x398] sm:$0xff]
        %v346 = vld [vmem:[%s1 + $0x3a0] sm:$0xff]
        %v347 = vld [vmem:[%s1 + $0x3a8] sm:$0xff]
        %v348 = vld [vmem:[%s1 + $0x3b0] sm:$0xff]
        %v349 = vld [vmem:[%s1 + $0x3b8] sm:$0xff]
        %v350 = vld [vmem:[%s1 + $0x3c0] sm:$0xff]
        %v351 = vld [vmem:[%s1 + $0x3c8] sm:$0xff]
        %v352 = vld [vmem:[%s1 + $0x3d0] sm:$0xff]
        %v353 = vld [vmem:[%s1 + $0x3d8] sm:$0xff]
        %v354 = vld [vmem:[%s1 + $0x3e0] sm:$0xff]
        %v355 = vld [vmem:[%s1 + $0x3e8] sm:$0xff]
        %v356 = vld [vmem:[%s1 + $0x3f0] sm:$0xff]
        %v357 = vld [vmem:[%s1 + $0x3f8] sm:$0xff]
        %v358 = vld [vmem:[%s1 + $0x400] sm:$0xff]
        %v359 = vld [vmem:[%s1 + $0x408] sm:$0xff]
        %v360 = vld [vmem:[%s1 + $0x410] sm:$0xff]
        %v361 = vld [vmem:[%s1 + $0x418] sm:$0xff]
        %v362 = vld [vmem:[%s1 + $0x420] sm:$0xff]
        %v363 = vld [vmem:[%s1 + $0x428] sm:$0xff]
        %v364 = vld [vmem:[%s1 + $0x430] sm:$0xff]
        %v365 = vld [vmem:[%s1 + $0x438] sm:$0xff]
        %v366 = vld [vmem:[%s1 + $0x440] sm:$0xff]
        %v367 = vld [vmem:[%s1 + $0x448] sm:$0xff]
        %v368 = vld [vmem:[%s1 + $0x450] sm:$0xff]
        %v369 = vld [vmem:[%s1 + $0x458] sm:$0xff]
        %v370 = vld [vmem:[%s1 + $0x460] sm:$0xff]
        %v371 = vld [vmem:[%s1 + $0x468] sm:$0xff]
        %v372 = vld [vmem:[%s1 + $0x470] sm:$0xff]
        %v373 = vld [vmem:[%s1 + $0x478] sm:$0xff]
        %v374 = vld [vmem:[%s1 + $0x480] sm:$0xff]
        %v375 = vld [vmem:[%s1 + $0x488] sm:$0xff]
        %v376 = vld [vmem:[%s1 + $0x490] sm:$0xff]
        %v377 = vld [vmem:[%s1 + $0x498] sm:$0xff]
        %v378 = vld [vmem:[%s1 + $0x4a0] sm:$0xff]
        %v379 = vld [vmem:[%s1 + $0x4a8] sm:$0xff]
        %v380 = vld [vmem:[%s1 + $0x4b0] sm:$0xff]
        %v381 = vld [vmem:[%s1 + $0x4b8] sm:$0xff]
        %v382 = vld [vmem:[%s1 + $0x4c0] sm:$0xff]
        %v383 = vld [vmem:[%s1 + $0x4c8] sm:$0xff]
        %v384 = vld [vmem:[%s1 + $0x4d0] sm:$0xff]
        %v385 = vld [vmem:[%s1 + $0x4d8] sm:$0xff]
        %v386 = vld [vmem:[%s1 + $0x4e0] sm:$0xff]
        %v387 = vld [vmem:[%s1 + $0x4e8] sm:$0xff]
        %v388 = vld [vmem:[%s1 + $0x4f0] sm:$0xff]
        %v389 = vld [vmem:[%s1 + $0x4f8] sm:$0xff]
        %v390 = vld [vmem:[%s1 + $0x500] sm:$0xff]
        %v391 = vld [vmem:[%s1 + $0x508] sm:$0xff]
        %v392 = vld [vmem:[%s1 + $0x510] sm:$0xff]
        %v393 = vld [vmem:[%s1 + $0x518] sm:$0xff]
        %v394 = vld [vmem:[%s1 + $0x520] sm:$0xff]
        %v395 = vld [vmem:[%s1 + $0x528] sm:$0xff]
        %v396 = vld [vmem:[%s1 + $0x530] sm:$0xff]
        %v397 = vld [vmem:[%s1 + $0x538] sm:$0xff]
        %v398 = vld [vmem:[%s1 + $0x540] sm:$0xff]
        %v399 = vld [vmem:[%s1 + $0x548] sm:$0xff]
        %v400 = vld [vmem:[%s1 + $0x550] sm:$0xff]
        %v401 = vld [vmem:[%s1 + $0x558] sm:$0xff]
        %v402 = vld [vmem:[%s1 + $0x560] sm:$0xff]
        %v403 = vld [vmem:[%s1 + $0x568] sm:$0xff]
        %v404 = vld [vmem:[%s1 + $0x570] sm:$0xff]
        %v405 = vld [vmem:[%s1 + $0x578] sm:$0xff]
        %v406 = vld [vmem:[%s1 + $0x580] sm:$0xff]
        %v407 = vld [vmem:[%s1 + $0x588] sm:$0xff]
        %v408 = vld [vmem:[%s1 + $0x590] sm:$0xff]
        %v409 = vld [vmem:[%s1 + $0x598] sm:$0xff]
        %v410 = vld [vmem:[%s1 + $0x5a0] sm:$0xff]
        %v411 = vld [vmem:[%s1 + $0x5a8] sm:$0xff]
        %v412 = vld [vmem:[%s1 + $0x5b0] sm:$0xff]
        %v413 = vld [vmem:[%s1 + $0x5b8] sm:$0xff]
        %v414 = vld [vmem:[%s1 + $0x5c0] sm:$0xff]
        %v415 = vld [vmem:[%s1 + $0x5c8] sm:$0xff]
        %v416 = vld [vmem:[%s1 + $0x5d0] sm:$0xff]
        %v417 = vld [vmem:[%s1 + $0x5d8] sm:$0xff]
        %v418 = vld [vmem:[%s1 + $0x5e0] sm:$0xff]
        %v419 = vld [vmem:[%s1 + $0x5e8] sm:$0xff]
        %v420 = vld [vmem:[%s1 + $0x5f0] sm:$0xff]
        %v421 = vld [vmem:[%s1 + $0x5f8] sm:$0xff]
        %v422 = vld [vmem:[%s1 + $0x600] sm:$0xff]
        %v423 = vld [vmem:[%s1 + $0x608] sm:$0xff]
        %v424 = vld [vmem:[%s1 + $0x610] sm:$0xff]
        %v425 = vld [vmem:[%s1 + $0x618] sm:$0xff]
        %v426 = vld [vmem:[%s2] sm:$0x3]
        %v428 = vlaneseq
        %v429 = vshrl.u32 %v428, 7
        %v430 = vsub.s32 0, %v429
        %v431 = vrot.slane %v426, %v430
        %v432 = vlaneseq
        %v433 = vshrl.u32 %v432, 7
        %v434 = vsub.s32 1, %v433
        %v435 = vrot.slane %v426, %v434
        %vm438 = vcmask 130048
        %v440 = vsel %vm438, %v229, 0
        %442 = vmatprep.subr.mxu0 %v231
        %443 = vmatpush1.msra.mxu0 %v230
        %444 = vmatprep.subr.mxu0 %v233
        %445 = vmatpush1.msra.mxu0 %v232
        %446 = vmatprep.subr.mxu0 %v235
        %447 = vmatpush1.msra.mxu0 %v234
        %448 = vmatprep.subr.mxu0 %v237
        %449 = vmatpush1.msra.mxu0 %v236
        %450 = vmatprep.subr.mxu0 %v239
        %451 = vmatpush1.msra.mxu0 %v238
        %452 = vmatprep.subr.mxu0 %v241
        %453 = vmatpush1.msra.mxu0 %v240
        %454 = vmatprep.subr.mxu0 %v243
        %455 = vmatpush1.msra.mxu0 %v242
        %456 = vmatprep.subr.mxu0 %v245
        %457 = vmatpush1.msra.mxu0 %v244
        %458 = vmatprep.subr.mxu0 %v247
        %459 = vmatpush1.msra.mxu0 %v246
        %460 = vmatprep.subr.mxu0 %v249
        %461 = vmatpush1.msra.mxu0 %v248
        %462 = vmatprep.subr.mxu0 %v251
        %463 = vmatpush1.msra.mxu0 %v250
        %464 = vmatprep.subr.mxu0 %v253
        %465 = vmatpush1.msra.mxu0 %v252
        %466 = vmatprep.subr.mxu0 %v255
        %467 = vmatpush1.msra.mxu0 %v254
        %468 = vmatprep.subr.mxu0 %v257
        %469 = vmatpush1.msra.mxu0 %v256
        %470 = vmatprep.subr.mxu0 %v259
        %471 = vmatpush1.msra.mxu0 %v258
        %472 = vmatprep.subr.mxu0 %v261
        %473 = vmatpush1.msra.mxu0 %v260
        %474 = vmatprep.subr.mxu0 %v263
        %475 = vmatpush1.msra.mxu0 %v262
        %476 = vmatprep.subr.mxu0 %v265
        %477 = vmatpush1.msra.mxu0 %v264
        %478 = vmatprep.subr.mxu0 %v267
        %479 = vmatpush1.msra.mxu0 %v266
        %480 = vmatprep.subr.mxu0 %v269
        %481 = vmatpush1.msra.mxu0 %v268
        %482 = vmatprep.subr.mxu0 %v271
        %483 = vmatpush1.msra.mxu0 %v270
        %484 = vmatprep.subr.mxu0 %v273
        %485 = vmatpush1.msra.mxu0 %v272
        %486 = vmatprep.subr.mxu0 %v275
        %487 = vmatpush1.msra.mxu0 %v274
        %488 = vmatprep.subr.mxu0 %v277
        %489 = vmatpush1.msra.mxu0 %v276
        %490 = vmatprep.subr.mxu0 %v279
        %491 = vmatpush1.msra.mxu0 %v278
        %492 = vmatprep.subr.mxu0 %v281
        %493 = vmatpush1.msra.mxu0 %v280
        %494 = vmatprep.subr.mxu0 %v283
        %495 = vmatpush1.msra.mxu0 %v282
        %496 = vmatprep.subr.mxu0 %v285
        %497 = vmatpush1.msra.mxu0 %v284
        %498 = vmatprep.subr.mxu0 %v287
        %499 = vmatpush1.msra.mxu0 %v286
        %500 = vmatprep.subr.mxu0 %v289
        %501 = vmatpush1.msra.mxu0 %v288
        %502 = vmatprep.subr.mxu0 %v291
        %503 = vmatpush1.msra.mxu0 %v290
        %504 = vmatprep.subr.mxu0 %v293
        %505 = vmatpush1.msra.mxu0 %v292
        %506 = vmatprep.mubr.f32.mxu0 %v224
        %507 = vmatmul.mubr.f32.gmra.mrb[0].mxu0 %v223
        %v508 = vpop.f32.mrb[0].mxu0
        %v509 = vadd.f32 %v431, %v508
        %v510 = vpop.f32.mrb[0].mxu0
        %v511 = vadd.f32 %v435, %v510
        %512 = vdwg.mxu0
        %513 = vmatprep.subr.mxu0 %v295
        %514 = vmatpush1.msra.mxu0 %v294
        %515 = vmatprep.subr.mxu0 %v297
        %516 = vmatpush1.msra.mxu0 %v296
        %517 = vmatprep.subr.mxu0 %v299
        %518 = vmatpush1.msra.mxu0 %v298
        %519 = vmatprep.subr.mxu0 %v301
        %520 = vmatpush1.msra.mxu0 %v300
        %521 = vmatprep.subr.mxu0 %v303
        %522 = vmatpush1.msra.mxu0 %v302
        %523 = vmatprep.subr.mxu0 %v305
        %524 = vmatpush1.msra.mxu0 %v304
        %525 = vmatprep.subr.mxu0 %v307
        %526 = vmatpush1.msra.mxu0 %v306
        %527 = vmatprep.subr.mxu0 %v309
        %528 = vmatpush1.msra.mxu0 %v308
        %529 = vmatprep.subr.mxu0 %v311
        %530 = vmatpush1.msra.mxu0 %v310
        %531 = vmatprep.subr.mxu0 %v313
        %532 = vmatpush1.msra.mxu0 %v312
        %533 = vmatprep.subr.mxu0 %v315
        %534 = vmatpush1.msra.mxu0 %v314
        %535 = vmatprep.subr.mxu0 %v317
        %536 = vmatpush1.msra.mxu0 %v316
        %537 = vmatprep.subr.mxu0 %v319
        %538 = vmatpush1.msra.mxu0 %v318
        %539 = vmatprep.subr.mxu0 %v321
        %540 = vmatpush1.msra.mxu0 %v320
        %541 = vmatprep.subr.mxu0 %v323
        %542 = vmatpush1.msra.mxu0 %v322
        %543 = vmatprep.subr.mxu0 %v325
        %544 = vmatpush1.msra.mxu0 %v324
        %545 = vmatprep.subr.mxu0 %v327
        %546 = vmatpush1.msra.mxu0 %v326
        %547 = vmatprep.subr.mxu0 %v329
        %548 = vmatpush1.msra.mxu0 %v328
        %549 = vmatprep.subr.mxu0 %v331
        %550 = vmatpush1.msra.mxu0 %v330
        %551 = vmatprep.subr.mxu0 %v333
        %552 = vmatpush1.msra.mxu0 %v332
        %553 = vmatprep.subr.mxu0 %v335
        %554 = vmatpush1.msra.mxu0 %v334
        %555 = vmatprep.subr.mxu0 %v337
        %556 = vmatpush1.msra.mxu0 %v336
        %557 = vmatprep.subr.mxu0 %v339
        %558 = vmatpush1.msra.mxu0 %v338
        %559 = vmatprep.subr.mxu0 %v341
        %560 = vmatpush1.msra.mxu0 %v340
        %561 = vmatprep.subr.mxu0 %v343
        %562 = vmatpush1.msra.mxu0 %v342
        %563 = vmatprep.subr.mxu0 %v345
        %564 = vmatpush1.msra.mxu0 %v344
        %565 = vmatprep.subr.mxu0 %v347
        %566 = vmatpush1.msra.mxu0 %v346
        %567 = vmatprep.subr.mxu0 %v349
        %568 = vmatpush1.msra.mxu0 %v348
        %569 = vmatprep.subr.mxu0 %v351
        %570 = vmatpush1.msra.mxu0 %v350
        %571 = vmatprep.subr.mxu0 %v353
        %572 = vmatpush1.msra.mxu0 %v352
        %573 = vmatprep.subr.mxu0 %v355
        %574 = vmatpush1.msra.mxu0 %v354
        %575 = vmatprep.subr.mxu0 %v357
        %576 = vmatpush1.msra.mxu0 %v356
        %577 = vmatprep.mubr.f32.mxu0 %v226
        %578 = vmatmul.mubr.f32.gmra.mrb[0].mxu0 %v225
        %v579 = vpop.f32.mrb[0].mxu0
        %v580 = vadd.f32 %v509, %v579
        %v581 = vpop.f32.mrb[0].mxu0
        %v582 = vadd.f32 %v511, %v581
        %583 = vdwg.mxu0
        %584 = vmatprep.subr.mxu0 %v359
        %585 = vmatpush1.msra.mxu0 %v358
        %586 = vmatprep.subr.mxu0 %v361
        %587 = vmatpush1.msra.mxu0 %v360
        %588 = vmatprep.subr.mxu0 %v363
        %589 = vmatpush1.msra.mxu0 %v362
        %590 = vmatprep.subr.mxu0 %v365
        %591 = vmatpush1.msra.mxu0 %v364
        %592 = vmatprep.subr.mxu0 %v367
        %593 = vmatpush1.msra.mxu0 %v366
        %594 = vmatprep.subr.mxu0 %v369
        %595 = vmatpush1.msra.mxu0 %v368
        %596 = vmatprep.subr.mxu0 %v371
        %597 = vmatpush1.msra.mxu0 %v370
        %598 = vmatprep.subr.mxu0 %v373
        %599 = vmatpush1.msra.mxu0 %v372
        %600 = vmatprep.subr.mxu0 %v375
        %601 = vmatpush1.msra.mxu0 %v374
        %602 = vmatprep.subr.mxu0 %v377
        %603 = vmatpush1.msra.mxu0 %v376
        %604 = vmatprep.subr.mxu0 %v379
        %605 = vmatpush1.msra.mxu0 %v378
        %606 = vmatprep.subr.mxu0 %v381
        %607 = vmatpush1.msra.mxu0 %v380
        %608 = vmatprep.subr.mxu0 %v383
        %609 = vmatpush1.msra.mxu0 %v382
        %610 = vmatprep.subr.mxu0 %v385
        %611 = vmatpush1.msra.mxu0 %v384
        %612 = vmatprep.subr.mxu0 %v387
        %613 = vmatpush1.msra.mxu0 %v386
        %614 = vmatprep.subr.mxu0 %v389
        %615 = vmatpush1.msra.mxu0 %v388
        %616 = vmatprep.subr.mxu0 %v391
        %617 = vmatpush1.msra.mxu0 %v390
        %618 = vmatprep.subr.mxu0 %v393
        %619 = vmatpush1.msra.mxu0 %v392
        %620 = vmatprep.subr.mxu0 %v395
        %621 = vmatpush1.msra.mxu0 %v394
        %622 = vmatprep.subr.mxu0 %v397
        %623 = vmatpush1.msra.mxu0 %v396
        %624 = vmatprep.subr.mxu0 %v399
        %625 = vmatpush1.msra.mxu0 %v398
        %626 = vmatprep.subr.mxu0 %v401
        %627 = vmatpush1.msra.mxu0 %v400
        %628 = vmatprep.subr.mxu0 %v403
        %629 = vmatpush1.msra.mxu0 %v402
        %630 = vmatprep.subr.mxu0 %v405
        %631 = vmatpush1.msra.mxu0 %v404
        %632 = vmatprep.subr.mxu0 %v407
        %633 = vmatpush1.msra.mxu0 %v406
        %634 = vmatprep.subr.mxu0 %v409
        %635 = vmatpush1.msra.mxu0 %v408
        %636 = vmatprep.subr.mxu0 %v411
        %637 = vmatpush1.msra.mxu0 %v410
        %638 = vmatprep.subr.mxu0 %v413
        %639 = vmatpush1.msra.mxu0 %v412
        %640 = vmatprep.subr.mxu0 %v415
        %641 = vmatpush1.msra.mxu0 %v414
        %642 = vmatprep.subr.mxu0 %v417
        %643 = vmatpush1.msra.mxu0 %v416
        %644 = vmatprep.subr.mxu0 %v419
        %645 = vmatpush1.msra.mxu0 %v418
        %646 = vmatprep.subr.mxu0 %v421
        %647 = vmatpush1.msra.mxu0 %v420
        %648 = vmatprep.mubr.f32.mxu0 %v228
        %649 = vmatmul.mubr.f32.gmra.mrb[0].mxu0 %v227
        %v650 = vpop.f32.mrb[0].mxu0
        %v651 = vadd.f32 %v580, %v650
        %v652 = vpop.f32.mrb[0].mxu0
        %v653 = vadd.f32 %v582, %v652
        %654 = vdwg.mxu0
        %655 = vmatprep.subr.mxu0 %v423
        %656 = vmatpush1.msra.mxu0 %v422
        %657 = vmatprep.subr.mxu0 %v425
        %658 = vmatpush1.msra.mxu0 %v424
        %659 = vmatprep.subr.mxu0 0.0
        %660 = vmatpush1.msra.mxu0 0.0
        %661 = vmatprep.subr.mxu0 0.0
        %662 = vmatpush1.msra.mxu0 0.0
        %663 = vmatprep.subr.mxu0 0.0
        %664 = vmatpush1.msra.mxu0 0.0
        %665 = vmatprep.subr.mxu0 0.0
        %666 = vmatpush1.msra.mxu0 0.0
        %667 = vmatprep.subr.mxu0 0.0
        %668 = vmatpush1.msra.mxu0 0.0
        %669 = vmatprep.subr.mxu0 0.0
        %670 = vmatpush1.msra.mxu0 0.0
        %671 = vmatprep.subr.mxu0 0.0
        %672 = vmatpush1.msra.mxu0 0.0
        %673 = vmatprep.subr.mxu0 0.0
        %674 = vmatpush1.msra.mxu0 0.0
        %675 = vmatprep.subr.mxu0 0.0
        %676 = vmatpush1.msra.mxu0 0.0
        %677 = vmatprep.subr.mxu0 0.0
        %678 = vmatpush1.msra.mxu0 0.0
        %679 = vmatprep.subr.mxu0 0.0
        %680 = vmatpush1.msra.mxu0 0.0
        %681 = vmatprep.subr.mxu0 0.0
        %682 = vmatpush1.msra.mxu0 0.0
        %683 = vmatprep.subr.mxu0 0.0
        %684 = vmatpush1.msra.mxu0 0.0
        %685 = vmatprep.subr.mxu0 0.0
        %686 = vmatpush1.msra.mxu0 0.0
        %687 = vmatprep.subr.mxu0 0.0
        %688 = vmatpush1.msra.mxu0 0.0
        %689 = vmatprep.subr.mxu0 0.0
        %690 = vmatpush1.msra.mxu0 0.0
        %691 = vmatprep.subr.mxu0 0.0
        %692 = vmatpush1.msra.mxu0 0.0
        %693 = vmatprep.subr.mxu0 0.0
        %694 = vmatpush1.msra.mxu0 0.0
        %695 = vmatprep.subr.mxu0 0.0
        %696 = vmatpush1.msra.mxu0 0.0
        %697 = vmatprep.subr.mxu0 0.0
        %698 = vmatpush1.msra.mxu0 0.0
        %699 = vmatprep.subr.mxu0 0.0
        %700 = vmatpush1.msra.mxu0 0.0
        %701 = vmatprep.subr.mxu0 0.0
        %702 = vmatpush1.msra.mxu0 0.0
        %703 = vmatprep.subr.mxu0 0.0
        %704 = vmatpush1.msra.mxu0 0.0
        %705 = vmatprep.subr.mxu0 0.0
        %706 = vmatpush1.msra.mxu0 0.0
        %707 = vmatprep.subr.mxu0 0.0
        %708 = vmatpush1.msra.mxu0 0.0
        %709 = vmatprep.subr.mxu0 0.0
        %710 = vmatpush1.msra.mxu0 0.0
        %711 = vmatprep.subr.mxu0 0.0
        %712 = vmatpush1.msra.mxu0 0.0
        %713 = vmatprep.subr.mxu0 0.0
        %714 = vmatpush1.msra.mxu0 0.0
        %715 = vmatprep.subr.mxu0 0.0
        %716 = vmatpush1.msra.mxu0 0.0
        %717 = vmatprep.subr.mxu0 0.0
        %718 = vmatpush1.msra.mxu0 0.0
        %719 = vmatprep.mubr.f32.mxu0 0.0
        %720 = vmatmul.mubr.f32.gmra.mrb[0].mxu0 %v440
        %v721 = vpop.f32.mrb[0].mxu0
        %v722 = vadd.f32 %v651, %v721
        %v723 = vpop.f32.mrb[0].mxu0
        %v724 = vadd.f32 %v653, %v723
        %725 = vdwg.mxu0
        %v726 = vxor.u32 %v722, 2147483648
        %v727 = vxor.u32 %v724, 2147483648
        %v728 = vmul.f32 %v726, 1.442695
        %v729 = vpow.pop %v728
        %v730 = vmul.f32 %v727, 1.442695
        %v731 = vpow.pop %v730
        %v732 = vadd.f32 %v729, 1.0
        %v733 = vadd.f32 %v731, 1.0
        %v734 = vrcp.pop %v732
        %v735 = vmul.f32 1.0, %v734
        %v736 = vrcp.pop %v733
        %v737 = vmul.f32 1.0, %v736
        %v738 = vld [vmem:[%s3] sm:$0xff]
        %v739 = vld [vmem:[%s3 + $0x8] sm:$0xff]
        %v740 = vld [vmem:[%s3 + $0x10] sm:$0xff]
        %v741 = vld [vmem:[%s3 + $0x18] sm:$0xff]
        %v742 = vld [vmem:[%s3 + $0x20] sm:$0xff]
        %v743 = vld [vmem:[%s3 + $0x28] sm:$0xff]
        %v744 = vld [vmem:[%s3 + $0x30] sm:$0xff]
        %v745 = vld [vmem:[%s3 + $0x38] sm:$0xff]
        %v746 = vld [vmem:[%s3 + $0x40] sm:$0xff]
        %v747 = vld [vmem:[%s3 + $0x48] sm:$0xff]
        %v748 = vld [vmem:[%s3 + $0x50] sm:$0xff]
        %v749 = vld [vmem:[%s3 + $0x58] sm:$0xff]
        %v750 = vld [vmem:[%s3 + $0x60] sm:$0xff]
        %v751 = vld [vmem:[%s3 + $0x68] sm:$0xff]
        %v752 = vld [vmem:[%s3 + $0x70] sm:$0xff]
        %v753 = vld [vmem:[%s3 + $0x78] sm:$0xff]
        %v754 = vld [vmem:[%s3 + $0x80] sm:$0xff]
        %v755 = vld [vmem:[%s3 + $0x88] sm:$0xff]
        %v756 = vld [vmem:[%s3 + $0x90] sm:$0xff]
        %v757 = vld [vmem:[%s3 + $0x98] sm:$0xff]
        %v758 = vld [vmem:[%s3 + $0xa0] sm:$0xff]
        %v759 = vld [vmem:[%s3 + $0xa8] sm:$0xff]
        %v760 = vld [vmem:[%s3 + $0xb0] sm:$0xff]
        %v761 = vld [vmem:[%s3 + $0xb8] sm:$0xff]
        %v762 = vld [vmem:[%s3 + $0xc0] sm:$0xff]
        %v763 = vld [vmem:[%s3 + $0xc8] sm:$0xff]
        %v764 = vld [vmem:[%s3 + $0xd0] sm:$0xff]
        %v765 = vld [vmem:[%s3 + $0xd8] sm:$0xff]
        %v766 = vld [vmem:[%s3 + $0xe0] sm:$0xff]
        %v767 = vld [vmem:[%s3 + $0xe8] sm:$0xff]
        %v768 = vld [vmem:[%s3 + $0xf0] sm:$0xff]
        %v769 = vld [vmem:[%s3 + $0xf8] sm:$0xff]
        %v770 = vld [vmem:[%s4] sm:$0x1]
        %v772 = vlaneseq
        %v773 = vshrl.u32 %v772, 7
        %v774 = vsub.s32 0, %v773
        %v775 = vrot.slane %v770, %v774
        %777 = vmatprep.subr.mxu0 0.0
        %778 = vmatpush1.msra.mxu0 %v738
        %779 = vmatprep.subr.mxu0 0.0
        %780 = vmatpush1.msra.mxu0 %v739
        %781 = vmatprep.subr.mxu0 0.0
        %782 = vmatpush1.msra.mxu0 %v740
        %783 = vmatprep.subr.mxu0 0.0
        %784 = vmatpush1.msra.mxu0 %v741
        %785 = vmatprep.subr.mxu0 0.0
        %786 = vmatpush1.msra.mxu0 %v742
        %787 = vmatprep.subr.mxu0 0.0
        %788 = vmatpush1.msra.mxu0 %v743
        %789 = vmatprep.subr.mxu0 0.0
        %790 = vmatpush1.msra.mxu0 %v744
        %791 = vmatprep.subr.mxu0 0.0
        %792 = vmatpush1.msra.mxu0 %v745
        %793 = vmatprep.subr.mxu0 0.0
        %794 = vmatpush1.msra.mxu0 %v746
        %795 = vmatprep.subr.mxu0 0.0
        %796 = vmatpush1.msra.mxu0 %v747
        %797 = vmatprep.subr.mxu0 0.0
        %798 = vmatpush1.msra.mxu0 %v748
        %799 = vmatprep.subr.mxu0 0.0
        %800 = vmatpush1.msra.mxu0 %v749
        %801 = vmatprep.subr.mxu0 0.0
        %802 = vmatpush1.msra.mxu0 %v750
        %803 = vmatprep.subr.mxu0 0.0
        %804 = vmatpush1.msra.mxu0 %v751
        %805 = vmatprep.subr.mxu0 0.0
        %806 = vmatpush1.msra.mxu0 %v752
        %807 = vmatprep.subr.mxu0 0.0
        %808 = vmatpush1.msra.mxu0 %v753
        %809 = vmatprep.subr.mxu0 0.0
        %810 = vmatpush1.msra.mxu0 %v754
        %811 = vmatprep.subr.mxu0 0.0
        %812 = vmatpush1.msra.mxu0 %v755
        %813 = vmatprep.subr.mxu0 0.0
        %814 = vmatpush1.msra.mxu0 %v756
        %815 = vmatprep.subr.mxu0 0.0
        %816 = vmatpush1.msra.mxu0 %v757
        %817 = vmatprep.subr.mxu0 0.0
        %818 = vmatpush1.msra.mxu0 %v758
        %819 = vmatprep.subr.mxu0 0.0
        %820 = vmatpush1.msra.mxu0 %v759
        %821 = vmatprep.subr.mxu0 0.0
        %822 = vmatpush1.msra.mxu0 %v760
        %823 = vmatprep.subr.mxu0 0.0
        %824 = vmatpush1.msra.mxu0 %v761
        %825 = vmatprep.subr.mxu0 0.0
        %826 = vmatpush1.msra.mxu0 %v762
        %827 = vmatprep.subr.mxu0 0.0
        %828 = vmatpush1.msra.mxu0 %v763
        %829 = vmatprep.subr.mxu0 0.0
        %830 = vmatpush1.msra.mxu0 %v764
        %831 = vmatprep.subr.mxu0 0.0
        %832 = vmatpush1.msra.mxu0 %v765
        %833 = vmatprep.subr.mxu0 0.0
        %834 = vmatpush1.msra.mxu0 %v766
        %835 = vmatprep.subr.mxu0 0.0
        %836 = vmatpush1.msra.mxu0 %v767
        %837 = vmatprep.subr.mxu0 0.0
        %838 = vmatpush1.msra.mxu0 %v768
        %839 = vmatprep.subr.mxu0 0.0
        %840 = vmatpush1.msra.mxu0 %v769
        %841 = vmatprep.mubr.f32.mxu0 %v737
        %842 = vmatmul.mubr.f32.gmra.mrb[0].mxu0 %v735
        %v843 = vpop.f32.mrb[0].mxu0
        %v844 = vadd.f32 %v775, %v843
        %v845 = vpop.f32.mrb[0].mxu0
        %846 = vdwg.mxu0
        %847 = vmax.xlane.f32.xlu0 %v844
        %v848 = vpop.xlane.xlu0 %847
        %v849 = vsub.f32 %v844, %v848
        %v850 = vmul.f32 %v849, 1.442695
        %v851 = vpow.pop %v850
        %852 = vadd.xlane.f32.xlu0 %v851
        %v853 = vpop.xlane.xlu0 %852
        %v854 = vrcp.pop %v853
        %v855 = vmul.f32 %v851, %v854
        %856 = vst [vmem:[%s217] sm:$0xff] %v855
        %s857 = sand.u32 %s137, 1
        %s858 = scalar_lea.sflag [#allocation3], %s857
        %s859 = sand.u32 %s137, 1
        %s860 = smul.addr %s859, 8
        %s861 = scalar_lea.vmem [#allocation2], %s860
        // Predicated region
        $region41: #{net_forward.1} parent=39 // pred_check
          %p862 = pneg %p147
        $region42: #{net_forward.1} parent=39 // pred_check_branch
          %864 = sbr.rel (%p862) target = $region44
        $region43: #{net_forward.1} parent=39 // pred_region
          %s866 = ssub.s32 128, 128
          %867 = vsyncadd %s858, %s866
          %s868 = smul.addr %s19, 128
          %s869 = scalar_lea.hbm %s5, %s868
          %s871 = sshll.u32 %s861, 4
          %s872 = int_to_ptr.vmem [resolvable:$true] %s871
          %874 = dma.vmem_to_hbm [thread:$0]  %s872, 128, %s869, %s858
        $region44: #{net_forward.1} parent=39 // pred_fallthru
          _
      $region40: #{net_forward.1} parent=5 // pred_fallthru
        _
      %p875 = scmp.le.s32.totalorder 2, %s14
      // Predicated region
      $region45: #{net_forward.1} parent=5 // pred_check
        %p876 = pneg %p875
      $region46: #{net_forward.1} parent=5 // pred_check_branch
        %878 = sbr.rel (%p876) target = $region48
      $region47: #{net_forward.1} parent=5 // pred_region
        %s879 = ssub.s32 %s14, 2
        // Predicated region
        $region49: #{net_forward.1} parent=47 // pred_check
          %p880 = pneg %p153
        $region50: #{net_forward.1} parent=47 // pred_check_branch
          %882 = sbr.rel (%p880) target = $region52
        $region51: #{net_forward.1} parent=47 // pred_region
          %s883 = sand.u32 %s138, 1
          %s884 = scalar_lea.sflag [#allocation3], %s883
          %s885 = sand.u32 %s138, 1
          %s886 = smul.addr %s885, 8
          %s887 = scalar_lea.vmem [#allocation2], %s886
          %888 = dma.done %s884, 128
        $region52: #{net_forward.1} parent=47 // pred_fallthru
          _
      $region48: #{net_forward.1} parent=5 // pred_fallthru
        _
    $region6: #{net_forward.1} parent=1 // loop_footer
      %s18 = sadd.s32 1, %s14
    $region7: #{net_forward.1} parent=1 // loop_footer_branch
      %13 = sbr.rel target = $region3
    $region8: #{net_forward.1} parent=1 // loop_exit
      _
    %889 = vsyncpa [#allocation3], 1
    %s890 = scalar_lea.sflag [#allocation3], 1
    %891 = vsyncpa %s890, 1

</llo_original>
